<compile_context>
chip_gen: v7x
topology: tpu7x:2x2x1
jax: 0.10.0
libtpu: 0.0.40
codegen_flags: <defaults>
</compile_context>

<pallas_src>
import math

import jax
import jax.numpy as jnp
from jax.experimental import pallas as pl
from jax.experimental.pallas import tpu as pltpu

CA = 420.0          # self.Ca = torch.tensor(420.0)
LANES = 128
SUBLANE_ALIGN = 32  # int8 native sublane tile (also a multiple of the f32 tile of 8)


def _round_up(x, m):
    return -(-x // m) * m


def _pick_max_tile_rows():
    """Per-generation default tile height (rows of 128 lanes)."""
    try:
        kind = jax.devices()[0].device_kind.lower()
    except Exception:
        return 2048
    if "v5" in kind:
        # v5e scoped-VMEM default is 16 MiB; ~8.5 MiB double-buffered fits.
        return 2048
    # v6e / v7x: bigger tiles amortize per-grid-step overhead against their
    # higher HBM bandwidth (~17-20 MiB double-buffered, under 32 MiB scoped).
    return 4096


def _make_kernel(num_fgs, fgs_streamed, an_scalar, gamma_scalar, vpd_scalar):
    """Builds the kernel body for the given operand configuration."""

    def kernel(*refs):
        it = iter(refs)
        if fgs_streamed:
            gs0_tab = next(it)   # SMEM (num_fgs,)
            a1_tab = next(it)    # SMEM (num_fgs,)
            d0_tab = next(it)    # SMEM (num_fgs,)
            fgs_ref = next(it)   # VMEM (tile_rows, 128) int8/int32
        else:
            par_ref = next(it)   # SMEM (3,): pre-gathered gs0, a1, D0
        an_ref = next(it)
        gamma_ref = next(it)
        vpd_ref = next(it)
        out_ref = next(it)

        shape = out_ref.shape

        if fgs_streamed:
            # In-kernel gather: unrolled where-chain against SMEM scalars.
            # NOTE: FGs values outside [0, num_fgs) silently resolve to group 0.
            fgs = fgs_ref[...].astype(jnp.int32)
            gs0 = jnp.full(shape, gs0_tab[0], jnp.float32)
            a1 = jnp.full(shape, a1_tab[0], jnp.float32)
            d0 = jnp.full(shape, d0_tab[0], jnp.float32)
            for f in range(1, num_fgs):
                sel = fgs == f
                gs0 = jnp.where(sel, gs0_tab[f], gs0)
                a1 = jnp.where(sel, a1_tab[f], a1)
                d0 = jnp.where(sel, d0_tab[f], d0)
        else:
            gs0 = par_ref[0]
            a1 = par_ref[1]
            d0 = par_ref[2]

        an = an_ref[0] if an_scalar else an_ref[...]
        gamma = gamma_ref[0] if gamma_scalar else gamma_ref[...]
        vpd = vpd_ref[0] if vpd_scalar else vpd_ref[...]

        # gs = gs0 + a1*A/(Ca - Gamma)/(1 + VPD/D0)
        #    = gs0 + (a1*A*D0) / ((Ca - Gamma) * (D0 + VPD))   -- single divide
        num = a1 * an * d0
        den = (CA - gamma) * (d0 + vpd)
        gs = gs0 + num / den
        out_ref[...] = jnp.broadcast_to(gs, shape).astype(out_ref.dtype)

    return kernel


def bbl_forward(gs0, a1, D0, FGs, An, Gamma, VPD, *, max_tile_rows=None):
    """Pallas implementation of BBL.forward()."""
    gs0 = jnp.asarray(gs0, jnp.float32)
    a1 = jnp.asarray(a1, jnp.float32)
    D0 = jnp.asarray(D0, jnp.float32)
    num_fgs = int(gs0.shape[0])

    FGs = jnp.asarray(FGs)
    An = jnp.asarray(An, jnp.float32)
    Gamma = jnp.asarray(Gamma, jnp.float32)
    VPD = jnp.asarray(VPD, jnp.float32)

    out_shape = jnp.broadcast_shapes(FGs.shape, An.shape, Gamma.shape, VPD.shape)
    n = int(math.prod(out_shape)) if len(out_shape) > 0 else 1
    if n == 0:
        return jnp.zeros(out_shape, jnp.float32)

    rows = -(-n // LANES)
    padded = rows * LANES
    pad = padded - n          # only the ragged (<128-elem) tail is padded

    if max_tile_rows is None:
        max_tile_rows = _pick_max_tile_rows()
    max_tile_rows = max(SUBLANE_ALIGN, _round_up(int(max_tile_rows), SUBLANE_ALIGN))

    # Aim for >=2 blocks when possible so the "parallel" grid axis can shard
    # across v7x's two TensorCores; harmless on v5e/v6e (single TC).
    tile_rows = min(max_tile_rows,
                    max(SUBLANE_ALIGN, _round_up(-(-rows // 2), SUBLANE_ALIGN)))
    grid = -(-rows // tile_rows)   # partial last block handled by Pallas

    # Fold the gather in the wrapper when FGs is a broadcast scalar (the torch
    # default FGs=[0]) or there is only one functional group: no FGs stream,
    # no where-chain, no broadcast materialization.
    fgs_streamed = (FGs.size != 1) and (num_fgs > 1)
    an_scalar = An.size == 1
    gamma_scalar = Gamma.size == 1
    vpd_scalar = VPD.size == 1

    def prep_stream(x, dtype):
        x = x.astype(dtype)
        if x.size == n:
            flat = x.reshape(-1)                           # free (contiguous)
        else:
            # TODO(synk): rare partial-broadcast pattern (1 < size < n);
            # materialized here because it cannot be expressed as a BlockSpec.
            flat = jnp.broadcast_to(x, out_shape).reshape(-1)
        if pad > 0:
            flat = jnp.pad(flat, (0, pad))
        return flat.reshape(rows, LANES)

    smem_spec = pl.BlockSpec(memory_space=pltpu.MemorySpace.SMEM)
    tile_spec = pl.BlockSpec((tile_rows, LANES), lambda i: (i, 0))

    operands = []
    in_specs = []
    if fgs_streamed:
        fgs_dtype = jnp.int8 if num_fgs <= 127 else jnp.int32
        operands += [gs0, a1, D0, prep_stream(FGs, fgs_dtype)]
        in_specs += [smem_spec, smem_spec, smem_spec, tile_spec]
    else:
        idx = FGs.reshape(-1)[0].astype(jnp.int32)
        params = jnp.stack([gs0[idx], a1[idx], D0[idx]])   # SMEM (3,)
        operands += [params]
        in_specs += [smem_spec]

    for x, is_scalar in ((An, an_scalar), (Gamma, gamma_scalar), (VPD, vpd_scalar)):
        if is_scalar:
            operands.append(x.reshape(1).astype(jnp.float32))
            in_specs.append(smem_spec)
        else:
            operands.append(prep_stream(x, jnp.float32))
            in_specs.append(tile_spec)

    kernel = _make_kernel(num_fgs, fgs_streamed, an_scalar, gamma_scalar, vpd_scalar)

    out2d = pl.pallas_call(
        kernel,
        out_shape=jax.ShapeDtypeStruct((rows, LANES), jnp.float32),
        grid_spec=pl.GridSpec(
            grid=(grid,),
            in_specs=in_specs,
            out_specs=tile_spec,
        ),
        compiler_params=pltpu.CompilerParams(
            dimension_semantics=("parallel",),
            vmem_limit_bytes=32 * 1024 * 1024,
        ),
    )(*operands)

    flat = out2d.reshape(-1)
    if pad > 0:
        flat = flat[:n]
    return flat.reshape(out_shape)


def bbl_reference(gs0, a1, D0, FGs, An, Gamma, VPD):
    gs0 = gs0[FGs]
    a1 = a1[FGs]
    D0 = D0[FGs]
    return gs0 + a1 * An / (CA - Gamma) / (1.0 + VPD / D0)


if __name__ == "__main__":
    key = jax.random.PRNGKey(0)
    k1, k2, k3, k4, k5, k6, k7 = jax.random.split(key, 7)

    # Small synthetic problem: 4 functional groups, 1024 leaves/sites.
    num_FGs = 4
    n_sites = 1024

    gs0 = jnp.ones((num_FGs,), jnp.float32) + 0.01 * jax.random.normal(k1, (num_FGs,))
    a1 = jnp.ones((num_FGs,), jnp.float32) + 0.01 * jax.random.normal(k2, (num_FGs,))
    D0 = jnp.ones((num_FGs,), jnp.float32) + 0.01 * jax.random.normal(k3, (num_FGs,))

    FGs = jax.random.randint(k4, (n_sites,), 0, num_FGs)
    An = 5.0 + 2.0 * jax.random.normal(k5, (n_sites,)).astype(jnp.float32)      # umol/m2/s
    Gamma = 40.0 + 1.0 * jax.random.normal(k6, (n_sites,)).astype(jnp.float32)  # ppm
    VPD = 1.5 + 0.3 * jax.random.normal(k7, (n_sites,)).astype(jnp.float32)     # kPa

    gs = jax.block_until_ready(bbl_forward(gs0, a1, D0, FGs, An, Gamma, VPD))
    ref = bbl_reference(gs0, a1, D0, FGs, An, Gamma, VPD)
    assert gs.shape == ref.shape and gs.dtype == jnp.float32
    assert jnp.allclose(gs, ref, rtol=1e-5, atol=1e-5), "mismatch vs reference"

    # Ragged size (not a multiple of 128) with the torch-default broadcast
    # FGs=[0]: exercises the SMEM-scalar parameter path + padded tail.
    n2 = 300
    FGs2 = jnp.zeros((1,), jnp.int32)
    An2 = 5.0 + 2.0 * jax.random.normal(k5, (n2,)).astype(jnp.float32)
    Gamma2 = 40.0 + 1.0 * jax.random.normal(k6, (n2,)).astype(jnp.float32)
    VPD2 = 1.5 + 0.3 * jax.random.normal(k7, (n2,)).astype(jnp.float32)

    gs2 = jax.block_until_ready(bbl_forward(gs0, a1, D0, FGs2, An2, Gamma2, VPD2))
    ref2 = bbl_reference(gs0, a1, D0, FGs2, An2, Gamma2, VPD2)
    assert gs2.shape == ref2.shape
    assert jnp.allclose(gs2, ref2, rtol=1e-5, atol=1e-5), "mismatch vs reference (ragged, scalar FGs)"

    # Ragged size with a full per-site FGs vector: exercises the streamed int8
    # FGs path with a partial last block.
    FGs3 = jax.random.randint(k4, (n2,), 0, num_FGs)
    gs3 = jax.block_until_ready(bbl_forward(gs0, a1, D0, FGs3, An2, Gamma2, VPD2))
    ref3 = bbl_reference(gs0, a1, D0, FGs3, An2, Gamma2, VPD2)
    assert gs3.shape == ref3.shape
    assert jnp.allclose(gs3, ref3, rtol=1e-5, atol=1e-5), "mismatch vs reference (ragged, streamed FGs)"

    print("KERNEL_OK")
</pallas_src>

<mosaic_0001>
module attributes {stable_mosaic.version = 11 : i64} {
  func.func @kernel(%arg0: i32, %arg1: memref<4xf32, #tpu.memory_space<smem>>, %arg2: memref<4xf32, #tpu.memory_space<smem>>, %arg3: memref<4xf32, #tpu.memory_space<smem>>, %arg4: memref<32x128xi8, #tpu.memory_space<vmem>>, %arg5: memref<32x128xf32, #tpu.memory_space<vmem>>, %arg6: memref<32x128xf32, #tpu.memory_space<vmem>>, %arg7: memref<32x128xf32, #tpu.memory_space<vmem>>, %arg8: memref<32x128xf32, #tpu.memory_space<vmem>>) attributes {dimension_semantics = [#tpu.dimension_semantics<parallel>], iteration_bounds = array<i64: 1>, scalar_prefetch = 0 : i64, scratch_operands = 0 : i64, tpu.core_type = #tpu.core_type<tc>, window_params = [{transform_indices = @transform_0, window_bounds = array<i64: 4>}, {transform_indices = @transform_1, window_bounds = array<i64: 4>}, {transform_indices = @transform_2, window_bounds = array<i64: 4>}, {transform_indices = @transform_3, window_bounds = array<i64: 32, 128>}, {transform_indices = @transform_4, window_bounds = array<i64: 32, 128>}, {transform_indices = @transform_5, window_bounds = array<i64: 32, 128>}, {transform_indices = @transform_6, window_bounds = array<i64: 32, 128>}, {transform_indices = @transform_7, window_bounds = array<i64: 32, 128>}]} {
    %c0 = arith.constant 0 : index
    %c0_0 = arith.constant 0 : index
    %0 = vector.load %arg4[%c0, %c0_0] : memref<32x128xi8, #tpu.memory_space<vmem>>, vector<32x128xi8>
    %1 = arith.extsi %0 : vector<32x128xi8> to vector<32x128xi32>
    %c0_1 = arith.constant 0 : index
    %2 = memref.load %arg1[%c0_1] : memref<4xf32, #tpu.memory_space<smem>>
    %3 = vector.broadcast %2 : f32 to vector<32x128xf32>
    %c0_2 = arith.constant 0 : index
    %4 = memref.load %arg2[%c0_2] : memref<4xf32, #tpu.memory_space<smem>>
    %5 = vector.broadcast %4 : f32 to vector<32x128xf32>
    %c0_3 = arith.constant 0 : index
    %6 = memref.load %arg3[%c0_3] : memref<4xf32, #tpu.memory_space<smem>>
    %7 = vector.broadcast %6 : f32 to vector<32x128xf32>
    %c1_i32 = arith.constant 1 : i32
    %8 = vector.broadcast %c1_i32 : i32 to vector<32x128xi32>
    %9 = arith.cmpi eq, %1, %8 : vector<32x128xi32>
    %c1 = arith.constant 1 : index
    %10 = memref.load %arg1[%c1] : memref<4xf32, #tpu.memory_space<smem>>
    %11 = vector.broadcast %10 : f32 to vector<32x128xf32>
    %12 = arith.select %9, %11, %3 : vector<32x128xi1>, vector<32x128xf32>
    %c1_4 = arith.constant 1 : index
    %13 = memref.load %arg2[%c1_4] : memref<4xf32, #tpu.memory_space<smem>>
    %14 = vector.broadcast %13 : f32 to vector<32x128xf32>
    %15 = arith.select %9, %14, %5 : vector<32x128xi1>, vector<32x128xf32>
    %c1_5 = arith.constant 1 : index
    %16 = memref.load %arg3[%c1_5] : memref<4xf32, #tpu.memory_space<smem>>
    %17 = vector.broadcast %16 : f32 to vector<32x128xf32>
    %18 = arith.select %9, %17, %7 : vector<32x128xi1>, vector<32x128xf32>
    %c2_i32 = arith.constant 2 : i32
    %19 = vector.broadcast %c2_i32 : i32 to vector<32x128xi32>
    %20 = arith.cmpi eq, %1, %19 : vector<32x128xi32>
    %c2 = arith.constant 2 : index
    %21 = memref.load %arg1[%c2] : memref<4xf32, #tpu.memory_space<smem>>
    %22 = vector.broadcast %21 : f32 to vector<32x128xf32>
    %23 = arith.select %20, %22, %12 : vector<32x128xi1>, vector<32x128xf32>
    %c2_6 = arith.constant 2 : index
    %24 = memref.load %arg2[%c2_6] : memref<4xf32, #tpu.memory_space<smem>>
    %25 = vector.broadcast %24 : f32 to vector<32x128xf32>
    %26 = arith.select %20, %25, %15 : vector<32x128xi1>, vector<32x128xf32>
    %c2_7 = arith.constant 2 : index
    %27 = memref.load %arg3[%c2_7] : memref<4xf32, #tpu.memory_space<smem>>
    %28 = vector.broadcast %27 : f32 to vector<32x128xf32>
    %29 = arith.select %20, %28, %18 : vector<32x128xi1>, vector<32x128xf32>
    %c3_i32 = arith.constant 3 : i32
    %30 = vector.broadcast %c3_i32 : i32 to vector<32x128xi32>
    %31 = arith.cmpi eq, %1, %30 : vector<32x128xi32>
    %c3 = arith.constant 3 : index
    %32 = memref.load %arg1[%c3] : memref<4xf32, #tpu.memory_space<smem>>
    %33 = vector.broadcast %32 : f32 to vector<32x128xf32>
    %34 = arith.select %31, %33, %23 : vector<32x128xi1>, vector<32x128xf32>
    %c3_8 = arith.constant 3 : index
    %35 = memref.load %arg2[%c3_8] : memref<4xf32, #tpu.memory_space<smem>>
    %36 = vector.broadcast %35 : f32 to vector<32x128xf32>
    %37 = arith.select %31, %36, %26 : vector<32x128xi1>, vector<32x128xf32>
    %c3_9 = arith.constant 3 : index
    %38 = memref.load %arg3[%c3_9] : memref<4xf32, #tpu.memory_space<smem>>
    %39 = vector.broadcast %38 : f32 to vector<32x128xf32>
    %40 = arith.select %31, %39, %29 : vector<32x128xi1>, vector<32x128xf32>
    %c0_10 = arith.constant 0 : index
    %c0_11 = arith.constant 0 : index
    %41 = vector.load %arg5[%c0_10, %c0_11] : memref<32x128xf32, #tpu.memory_space<vmem>>, vector<32x128xf32>
    %c0_12 = arith.constant 0 : index
    %c0_13 = arith.constant 0 : index
    %42 = vector.load %arg6[%c0_12, %c0_13] : memref<32x128xf32, #tpu.memory_space<vmem>>, vector<32x128xf32>
    %c0_14 = arith.constant 0 : index
    %c0_15 = arith.constant 0 : index
    %43 = vector.load %arg7[%c0_14, %c0_15] : memref<32x128xf32, #tpu.memory_space<vmem>>, vector<32x128xf32>
    %44 = arith.mulf %37, %41 : vector<32x128xf32>
    %45 = arith.mulf %44, %40 : vector<32x128xf32>
    %cst = arith.constant 4.200000e+02 : f32
    %46 = vector.broadcast %cst : f32 to vector<32x128xf32>
    %47 = arith.subf %46, %42 : vector<32x128xf32>
    %48 = arith.addf %40, %43 : vector<32x128xf32>
    %49 = arith.mulf %47, %48 : vector<32x128xf32>
    %50 = arith.divf %45, %49 : vector<32x128xf32>
    %51 = arith.addf %34, %50 : vector<32x128xf32>
    %c0_16 = arith.constant 0 : index
    %c0_17 = arith.constant 0 : index
    %52 = vector.load %arg8[%c0_16, %c0_17] : memref<32x128xf32, #tpu.memory_space<vmem>>, vector<32x128xf32>
    tpu.vector_store %arg8[%c0_16, %c0_17], %51 {strides = array<i32>} : memref<32x128xf32, #tpu.memory_space<vmem>>, vector<32x128xf32>,
    return
  }
  func.func @transform_0(%arg0: i32) -> i32 {
    %c0_i32 = arith.constant 0 : i32
    %c0_i32_0 = arith.constant 0 : i32
    return %c0_i32 : i32
  }
  func.func @transform_1(%arg0: i32) -> i32 {
    %c0_i32 = arith.constant 0 : i32
    %c0_i32_0 = arith.constant 0 : i32
    return %c0_i32 : i32
  }
  func.func @transform_2(%arg0: i32) -> i32 {
    %c0_i32 = arith.constant 0 : i32
    %c0_i32_0 = arith.constant 0 : i32
    return %c0_i32 : i32
  }
  func.func @transform_3(%arg0: i32) -> (i32, i32) {
    %c0_i32 = arith.constant 0 : i32
    %c0_i32_0 = arith.constant 0 : i32
    return %arg0, %c0_i32 : i32, i32
  }
  func.func @transform_4(%arg0: i32) -> (i32, i32) {
    %c0_i32 = arith.constant 0 : i32
    %c0_i32_0 = arith.constant 0 : i32
    return %arg0, %c0_i32 : i32, i32
  }
  func.func @transform_5(%arg0: i32) -> (i32, i32) {
    %c0_i32 = arith.constant 0 : i32
    %c0_i32_0 = arith.constant 0 : i32
    return %arg0, %c0_i32 : i32, i32
  }
  func.func @transform_6(%arg0: i32) -> (i32, i32) {
    %c0_i32 = arith.constant 0 : i32
    %c0_i32_0 = arith.constant 0 : i32
    return %arg0, %c0_i32 : i32, i32
  }
  func.func @transform_7(%arg0: i32) -> (i32, i32) {
    %c0_i32 = arith.constant 0 : i32
    %c0_i32_0 = arith.constant 0 : i32
    return %arg0, %c0_i32 : i32, i32
  }
}

</mosaic_0001>

<llo_original>
// kernel: tpu_custom_call.1
$region0: #{tpu_custom_call.1}
  #allocation0 [shape = 'u32[]', space=smem, size = 0x4, offset = 0x4, fixed_abs, tag = 'smem constant byte address 0x4 - core index']
  #allocation1 [shape = 'u32[144,128]{1,0:T(1,128)}', space=vmem, size = 0x12000, scoped, tag = 'internal scratch']
  %s0 = inlined_call_operand.hbm [shape: f32[4], index: 0, kind: input, shape index: {}]
  %s1 = inlined_call_operand.hbm [shape: f32[4], index: 1, kind: input, shape index: {}]
  %s2 = inlined_call_operand.hbm [shape: f32[4], index: 2, kind: input, shape index: {}]
  %s3 = inlined_call_operand.vmem [shape: s8[8,128], index: 3, kind: input, shape index: {}]
  %s4 = inlined_call_operand.vmem [shape: f32[8,128], index: 4, kind: input, shape index: {}]
  %s5 = inlined_call_operand.vmem [shape: f32[8,128], index: 5, kind: input, shape index: {}]
  %s6 = inlined_call_operand.hbm [shape: f32[8,128], index: 6, kind: input, shape index: {}]
  %s7 = inlined_call_operand.hbm [shape: f32[8,128], index: 7, kind: output, shape index: {}]
  %s8 = sld [smem:[#allocation0]]
  $region54: #{tpu_custom_call.1} parent=0
    _
  %s10 = ssub.s32 1, %s8
  %s11 = scalar_select 0, %s10, %s8
  $region1: #{tpu_custom_call.1} parent=0
    #allocation2 [shape = 'u8[512]{0}', space=smem, size = 0x200, scoped, tag = 'input window, operand 0, single buffered']
    #allocation3 [shape = 's32[1]{0}', space=sflag, size = 0x4, scoped, tag = 'scoped memory for tpu_custom_call.1']
    #allocation4 [shape = 's32[1]{0}', space=sflag, size = 0x4, scoped, tag = 'scoped memory for tpu_custom_call.1']
    #allocation5 [shape = 's32[1]{0}', space=sflag, size = 0x4, scoped, tag = 'scoped memory for tpu_custom_call.1']
    #allocation6 [shape = 'u8[512]{0}', space=smem, size = 0x200, scoped, tag = 'input window, operand 1, single buffered']
    #allocation7 [shape = 's32[1]{0}', space=sflag, size = 0x4, scoped, tag = 'scoped memory for tpu_custom_call.1']
    #allocation8 [shape = 'u8[512]{0}', space=smem, size = 0x200, scoped, tag = 'input window, operand 2, single buffered']
    #allocation9 [shape = 'u8[16384]{0}', space=vmem, size = 0x4000, scoped, tag = 'input window, operand 6, single buffered']
    #allocation10 [shape = 'u8[16384]{0}', space=vmem, size = 0x4000, scoped, tag = 'output window, operand 0, single buffered']
    %12 = vsyncpa [#allocation5], 0
    %13 = vsyncpa [#allocation7], 0
    %14 = vsyncpa [#allocation3], 0
    %15 = vsyncpa [#allocation4], 0
    // Predicated region
    $region2: #{tpu_custom_call.1} parent=1 // pred_check
      _
    $region3: #{tpu_custom_call.1} parent=1 // pred_check_branch
      %17 = sbr.rel (0) target = $region5
    $region4: #{tpu_custom_call.1} parent=1 // pred_region
      %s19 = ssub.s32 16, 16
      %20 = vsyncadd [#allocation5], %s19
      %23 = dma.hbm_to_smem %s0, 16, [#allocation2], [#allocation5]
    $region5: #{tpu_custom_call.1} parent=1 // pred_fallthru
      _
    // Predicated region
    $region6: #{tpu_custom_call.1} parent=1 // pred_check
      _
    $region7: #{tpu_custom_call.1} parent=1 // pred_check_branch
      %25 = sbr.rel (0) target = $region9
    $region8: #{tpu_custom_call.1} parent=1 // pred_region
      %s27 = ssub.s32 16, 16
      %28 = vsyncadd [#allocation7], %s27
      %31 = dma.hbm_to_smem %s1, 16, [#allocation6], [#allocation7]
    $region9: #{tpu_custom_call.1} parent=1 // pred_fallthru
      _
    // Predicated region
    $region10: #{tpu_custom_call.1} parent=1 // pred_check
      _
    $region11: #{tpu_custom_call.1} parent=1 // pred_check_branch
      %33 = sbr.rel (0) target = $region13
    $region12: #{tpu_custom_call.1} parent=1 // pred_region
      %s35 = ssub.s32 16, 16
      %36 = vsyncadd [#allocation7], %s35
      %39 = dma.hbm_to_smem %s2, 16, [#allocation8], [#allocation7]
    $region13: #{tpu_custom_call.1} parent=1 // pred_fallthru
      _
    // Predicated region
    $region14: #{tpu_custom_call.1} parent=1 // pred_check
      _
    $region15: #{tpu_custom_call.1} parent=1 // pred_check_branch
      %41 = sbr.rel (0) target = $region17
    $region16: #{tpu_custom_call.1} parent=1 // pred_region
      _
    $region17: #{tpu_custom_call.1} parent=1 // pred_fallthru
      _
    // Predicated region
    $region18: #{tpu_custom_call.1} parent=1 // pred_check
      _
    $region19: #{tpu_custom_call.1} parent=1 // pred_check_branch
      %43 = sbr.rel (0) target = $region21
    $region20: #{tpu_custom_call.1} parent=1 // pred_region
      _
    $region21: #{tpu_custom_call.1} parent=1 // pred_fallthru
      _
    // Predicated region
    $region22: #{tpu_custom_call.1} parent=1 // pred_check
      _
    $region23: #{tpu_custom_call.1} parent=1 // pred_check_branch
      %45 = sbr.rel (0) target = $region25
    $region24: #{tpu_custom_call.1} parent=1 // pred_region
      _
    $region25: #{tpu_custom_call.1} parent=1 // pred_fallthru
      _
    // Predicated region
    $region26: #{tpu_custom_call.1} parent=1 // pred_check
      _
    $region27: #{tpu_custom_call.1} parent=1 // pred_check_branch
      %47 = sbr.rel (0) target = $region29
    $region28: #{tpu_custom_call.1} parent=1 // pred_region
      %s49 = ssub.s32 512, 128
      %50 = vsyncadd [#allocation3], %s49
      %s51 = sshll.u32 [#allocation9], 4
      %s52 = int_to_ptr.vmem [resolvable:$true] %s51
      %57 = dma.hbm_to_vmem [thread:$0]  %s6, 128, %s52, [#allocation3], 128, 128, 8
    $region29: #{tpu_custom_call.1} parent=1 // pred_fallthru
      _
    // Predicated region
    $region30: #{tpu_custom_call.1} parent=1 // pred_check
      _
    $region31: #{tpu_custom_call.1} parent=1 // pred_check_branch
      %59 = sbr.rel (0) target = $region33
    $region32: #{tpu_custom_call.1} parent=1 // pred_region
      %60 = dma.done [#allocation5], 16
    $region33: #{tpu_custom_call.1} parent=1 // pred_fallthru
      _
    // Predicated region
    $region34: #{tpu_custom_call.1} parent=1 // pred_check
      _
    $region35: #{tpu_custom_call.1} parent=1 // pred_check_branch
      %62 = sbr.rel (0) target = $region37
    $region36: #{tpu_custom_call.1} parent=1 // pred_region
      %63 = dma.done [#allocation7], 16
    $region37: #{tpu_custom_call.1} parent=1 // pred_fallthru
      _
    // Predicated region
    $region38: #{tpu_custom_call.1} parent=1 // pred_check
      _
    $region39: #{tpu_custom_call.1} parent=1 // pred_check_branch
      %65 = sbr.rel (0) target = $region41
    $region40: #{tpu_custom_call.1} parent=1 // pred_region
      %66 = dma.done [#allocation7], 16
    $region41: #{tpu_custom_call.1} parent=1 // pred_fallthru
      _
    // Predicated region
    $region42: #{tpu_custom_call.1} parent=1 // pred_check
      _
    $region43: #{tpu_custom_call.1} parent=1 // pred_check_branch
      %68 = sbr.rel (0) target = $region45
    $region44: #{tpu_custom_call.1} parent=1 // pred_region
      %69 = dma.done [#allocation3], 512
    $region45: #{tpu_custom_call.1} parent=1 // pred_fallthru
      _
    %70 = sfence
    %v71 = vld [vmem:[%s3] sm:$0x3]
    %v72 = vld [vmem:[%s3 + $0x2] sm:$0x3]
    %v73 = vld [vmem:[%s3 + $0x4] sm:$0x3]
    %v74 = vld [vmem:[%s3 + $0x6] sm:$0x3]
    %v75 = vunpack.c.0.s8 %v71
    %v76 = vunpack.c.0.s8 %v72
    %v77 = vunpack.c.0.s8 %v73
    %v78 = vunpack.c.0.s8 %v74
    %s79 = sld [smem:[#allocation2]]
    %v80 = vstv %s79
    %s81 = sld [smem:[#allocation6]]
    %v82 = vstv %s81
    %s83 = sld [smem:[#allocation8]]
    %v84 = vstv %s83
    %vm85 = vcmp.eq.s32.totalorder %v75, 1
    %vm86 = vcmp.eq.s32.totalorder %v76, 1
    %vm87 = vcmp.eq.s32.totalorder %v77, 1
    %vm88 = vcmp.eq.s32.totalorder %v78, 1
    %s89 = sld [smem:[#allocation2 + $0x1]]
    %v90 = vstv %s89
    %v91 = vsel %vm85, %v90, %v80
    %v92 = vsel %vm86, %v90, %v80
    %v93 = vsel %vm87, %v90, %v80
    %v94 = vsel %vm88, %v90, %v80
    %s95 = sld [smem:[#allocation6 + $0x1]]
    %v96 = vstv %s95
    %v97 = vsel %vm85, %v96, %v82
    %v98 = vsel %vm86, %v96, %v82
    %v99 = vsel %vm87, %v96, %v82
    %v100 = vsel %vm88, %v96, %v82
    %s101 = sld [smem:[#allocation8 + $0x1]]
    %v102 = vstv %s101
    %v103 = vsel %vm85, %v102, %v84
    %v104 = vsel %vm86, %v102, %v84
    %v105 = vsel %vm87, %v102, %v84
    %v106 = vsel %vm88, %v102, %v84
    %vm107 = vcmp.eq.s32.totalorder %v75, 2
    %vm108 = vcmp.eq.s32.totalorder %v76, 2
    %vm109 = vcmp.eq.s32.totalorder %v77, 2
    %vm110 = vcmp.eq.s32.totalorder %v78, 2
    %s111 = sld [smem:[#allocation2 + $0x2]]
    %v112 = vstv %s111
    %v113 = vsel %vm107, %v112, %v91
    %v114 = vsel %vm108, %v112, %v92
    %v115 = vsel %vm109, %v112, %v93
    %v116 = vsel %vm110, %v112, %v94
    %s117 = sld [smem:[#allocation6 + $0x2]]
    %v118 = vstv %s117
    %v119 = vsel %vm107, %v118, %v97
    %v120 = vsel %vm108, %v118, %v98
    %v121 = vsel %vm109, %v118, %v99
    %v122 = vsel %vm110, %v118, %v100
    %s123 = sld [smem:[#allocation8 + $0x2]]
    %v124 = vstv %s123
    %v125 = vsel %vm107, %v124, %v103
    %v126 = vsel %vm108, %v124, %v104
    %v127 = vsel %vm109, %v124, %v105
    %v128 = vsel %vm110, %v124, %v106
    %vm129 = vcmp.eq.s32.totalorder %v75, 3
    %vm130 = vcmp.eq.s32.totalorder %v76, 3
    %vm131 = vcmp.eq.s32.totalorder %v77, 3
    %vm132 = vcmp.eq.s32.totalorder %v78, 3
    %s133 = sld [smem:[#allocation2 + $0x3]]
    %v134 = vstv %s133
    %v135 = vsel %vm129, %v134, %v113
    %v136 = vsel %vm130, %v134, %v114
    %v137 = vsel %vm131, %v134, %v115
    %v138 = vsel %vm132, %v134, %v116
    %s139 = sld [smem:[#allocation6 + $0x3]]
    %v140 = vstv %s139
    %v141 = vsel %vm129, %v140, %v119
    %v142 = vsel %vm130, %v140, %v120
    %v143 = vsel %vm131, %v140, %v121
    %v144 = vsel %vm132, %v140, %v122
    %s145 = sld [smem:[#allocation8 + $0x3]]
    %v146 = vstv %s145
    %v147 = vsel %vm129, %v146, %v125
    %v148 = vsel %vm130, %v146, %v126
    %v149 = vsel %vm131, %v146, %v127
    %v150 = vsel %vm132, %v146, %v128
    %v151 = vld [vmem:[%s4] sm:$0xff]
    %v152 = vld [vmem:[%s4 + $0x8] sm:$0xff]
    %v153 = vld [vmem:[%s4 + $0x10] sm:$0xff]
    %v154 = vld [vmem:[%s4 + $0x18] sm:$0xff]
    %v155 = vld [vmem:[%s5] sm:$0xff]
    %v156 = vld [vmem:[%s5 + $0x8] sm:$0xff]
    %v157 = vld [vmem:[%s5 + $0x10] sm:$0xff]
    %v158 = vld [vmem:[%s5 + $0x18] sm:$0xff]
    %v159 = vld [vmem:[#allocation9] sm:$0xff]
    %v160 = vld [vmem:[#allocation9 + $0x8] sm:$0xff]
    %v161 = vld [vmem:[#allocation9 + $0x10] sm:$0xff]
    %v162 = vld [vmem:[#allocation9 + $0x18] sm:$0xff]
    %v163 = vmul.f32 %v141, %v151
    %v164 = vmul.f32 %v142, %v152
    %v165 = vmul.f32 %v143, %v153
    %v166 = vmul.f32 %v144, %v154
    %v167 = vmul.f32 %v163, %v147
    %v168 = vmul.f32 %v164, %v148
    %v169 = vmul.f32 %v165, %v149
    %v170 = vmul.f32 %v166, %v150
    %v171 = vsub.f32 420.0, %v155
    %v172 = vsub.f32 420.0, %v156
    %v173 = vsub.f32 420.0, %v157
    %v174 = vsub.f32 420.0, %v158
    %v175 = vadd.f32 %v147, %v159
    %v176 = vadd.f32 %v148, %v160
    %v177 = vadd.f32 %v149, %v161
    %v178 = vadd.f32 %v150, %v162
    %v179 = vmul.f32 %v171, %v175
    %v180 = vmul.f32 %v172, %v176
    %v181 = vmul.f32 %v173, %v177
    %v182 = vmul.f32 %v174, %v178
    %v183 = vrcp.pop %v179
    %v184 = vmul.f32 %v167, %v183
    %v185 = vrcp.pop %v180
    %v186 = vmul.f32 %v168, %v185
    %v187 = vrcp.pop %v181
    %v188 = vmul.f32 %v169, %v187
    %v189 = vrcp.pop %v182
    %v190 = vmul.f32 %v170, %v189
    %v191 = vadd.f32 %v135, %v184
    %v192 = vadd.f32 %v136, %v186
    %v193 = vadd.f32 %v137, %v188
    %v194 = vadd.f32 %v138, %v190
    %195 = vst [vmem:[#allocation10] sm:$0xff] %v191
    %196 = vst [vmem:[#allocation10 + $0x8] sm:$0xff] %v192
    %197 = vst [vmem:[#allocation10 + $0x10] sm:$0xff] %v193
    %198 = vst [vmem:[#allocation10 + $0x18] sm:$0xff] %v194
    // Predicated region
    $region46: #{tpu_custom_call.1} parent=1 // pred_check
      _
    $region47: #{tpu_custom_call.1} parent=1 // pred_check_branch
      %200 = sbr.rel (0) target = $region49
    $region48: #{tpu_custom_call.1} parent=1 // pred_region
      %s202 = ssub.s32 512, 128
      %203 = vsyncadd [#allocation4], %s202
      %s204 = sshll.u32 [#allocation10], 4
      %s205 = int_to_ptr.vmem [resolvable:$true] %s204
      %210 = dma.vmem_to_hbm [thread:$0]  %s205, 128, %s7, [#allocation4], 128, 128, 8
    $region49: #{tpu_custom_call.1} parent=1 // pred_fallthru
      _
    // Predicated region
    $region50: #{tpu_custom_call.1} parent=1 // pred_check
      _
    $region51: #{tpu_custom_call.1} parent=1 // pred_check_branch
      %212 = sbr.rel (0) target = $region53
    $region52: #{tpu_custom_call.1} parent=1 // pred_region
      %213 = dma.done [#allocation4], 512
    $region53: #{tpu_custom_call.1} parent=1 // pred_fallthru
      _
    %214 = vsyncpa [#allocation3], 1
    %215 = vsyncpa [#allocation4], 1
    %216 = vsyncpa [#allocation5], 1
    %217 = vsyncpa [#allocation7], 1

</llo_original>
